<compile_context>
chip_gen: v7x
topology: tpu7x:2x2x1
jax: 0.10.0
libtpu: 0.0.40
codegen_flags: <defaults>
</compile_context>

<pallas_src>
import jax
import jax.numpy as jnp
from jax.experimental import pallas as pl
from jax.experimental.pallas import tpu as pltpu


_SUBLANE = 8  # batch-tile granularity (f32/bf16 sublane multiple)


def _round_up(n, m):
    return ((n + m - 1) // m) * m


def _vmem_limit_bytes():
    # v5e/v6e: 128 MiB physical -> 96 MiB cap; v7x: 64 MiB physical -> 48 MiB cap.
    try:
        cap = pltpu.get_tpu_info().vmem_capacity_bytes
        return int(min(cap * 3 // 4, 96 * 1024 * 1024))
    except Exception:
        return 48 * 1024 * 1024  # conservative, safe on every generation


# --------------------------------------------------------------------------- #
# Kernels
# --------------------------------------------------------------------------- #
def _fused3_kernel(x_ref, w_ref, b_ref, o_ref):
    # Single affine map per batch tile: y = x @ W_eff + b_eff (f32 MXU accumulation).
    y = jnp.dot(x_ref[...], w_ref[...], preferred_element_type=jnp.float32)
    o_ref[...] = (y + b_ref[...]).astype(o_ref.dtype)


def _fused2_kernel(x_ref, w12_ref, b12_ref, w3_ref, b3_ref, o_ref):
    # Layers 1-2 fused, layer 3 kept separate (used when nr_classes > latent_dim).
    h = jnp.dot(x_ref[...], w12_ref[...], preferred_element_type=jnp.float32)
    h = (h + b12_ref[...]).astype(w3_ref.dtype)
    y = jnp.dot(h, w3_ref[...], preferred_element_type=jnp.float32)
    o_ref[...] = (y + b3_ref[...]).astype(o_ref.dtype)


# --------------------------------------------------------------------------- #
# Param fusion (hoisted out of the per-call hot path)
# --------------------------------------------------------------------------- #
def prepare_decoder_params(params, *, compute_dtype=jnp.bfloat16):
    """Fuse the three Linear layers once. Returns the dict consumed by
    three_layer_decoder(). Exact in real arithmetic (no nonlinearities);
    rounding differs slightly from three chained f32 dots."""
    w1, b1 = params["w1"], params["b1"]
    w2, b2 = params["w2"], params["b2"]
    w3, b3 = params["w3"], params["b3"]
    latent_dim = w1.shape[0]
    nr_classes = w3.shape[1]

    if nr_classes <= latent_dim:
        # Full fusion: one matmul, weight footprint D*C.
        w_eff = (w1 @ w2 @ w3).astype(compute_dtype)
        b_eff = ((b1 @ w2 + b2) @ w3 + b3).astype(jnp.float32).reshape(1, -1)
        return {"mode": "fused3", "w": w_eff, "b": b_eff}

    # Many classes: fusing all three would inflate flops/weight bytes (D*C > D*D/4+D/4*C).
    w12 = (w1 @ w2).astype(compute_dtype)               # (D, D//4)
    b12 = (b1 @ w2 + b2).astype(jnp.float32).reshape(1, -1)
    return {
        "mode": "fused2",
        "w12": w12,
        "b12": b12,
        "w3": w3.astype(compute_dtype),
        "b3": b3.astype(jnp.float32).reshape(1, -1),
    }


# --------------------------------------------------------------------------- #
# Hot path
# --------------------------------------------------------------------------- #
def three_layer_decoder(x, fused, *, batch_tile=4096):
    """x: (batch, latent_dim). fused: output of prepare_decoder_params()."""
    batch, latent_dim = x.shape
    mode = fused["mode"]
    compute_dtype = (fused["w"] if mode == "fused3" else fused["w12"]).dtype
    out_dtype = x.dtype
    x_c = x.astype(compute_dtype)

    # Batch tiling: large tiles amortize the ~0.35us per-grid-step overhead; keep
    # >= 2 grid steps when the batch allows so v7x's two TensorCores both get work.
    tb = max(_SUBLANE, min(batch_tile, _round_up(batch, _SUBLANE)))
    if batch > 2 * _SUBLANE:
        tb = min(tb, _round_up(pl.cdiv(batch, 2), _SUBLANE))
    grid = (pl.cdiv(batch, tb),)   # ragged last block: OOB output rows are masked

    compiler_params = pltpu.CompilerParams(
        dimension_semantics=("parallel",),
        vmem_limit_bytes=_vmem_limit_bytes(),
    )

    def row_spec(ncols):
        return pl.BlockSpec((tb, ncols), lambda i: (i, 0), memory_space=pltpu.VMEM)

    def const_spec(shape):
        # Constant index_map -> Pallas keeps the block VMEM-resident (no per-step DMA).
        return pl.BlockSpec(shape, lambda i: (0, 0), memory_space=pltpu.VMEM)

    if mode == "fused3":
        w, b = fused["w"], fused["b"]
        nr_classes = w.shape[1]
        cost = pl.CostEstimate(
            flops=2 * batch * latent_dim * nr_classes,
            transcendentals=0,
            bytes_accessed=(x_c.size * x_c.dtype.itemsize
                            + w.size * w.dtype.itemsize
                            + b.size * b.dtype.itemsize
                            + batch * nr_classes * jnp.dtype(out_dtype).itemsize),
        )
        return pl.pallas_call(
            _fused3_kernel,
            out_shape=jax.ShapeDtypeStruct((batch, nr_classes), out_dtype),
            grid=grid,
            in_specs=[
                row_spec(latent_dim),
                const_spec((latent_dim, nr_classes)),
                const_spec((1, nr_classes)),
            ],
            out_specs=row_spec(nr_classes),
            compiler_params=compiler_params,
            cost_estimate=cost,
        )(x_c, w, b)

    w12, b12, w3, b3 = fused["w12"], fused["b12"], fused["w3"], fused["b3"]
    hidden = w12.shape[1]
    nr_classes = w3.shape[1]
    cost = pl.CostEstimate(
        flops=2 * batch * latent_dim * hidden + 2 * batch * hidden * nr_classes,
        transcendentals=0,
        bytes_accessed=(x_c.size * x_c.dtype.itemsize
                        + w12.size * w12.dtype.itemsize + b12.size * b12.dtype.itemsize
                        + w3.size * w3.dtype.itemsize + b3.size * b3.dtype.itemsize
                        + batch * nr_classes * jnp.dtype(out_dtype).itemsize),
    )
    return pl.pallas_call(
        _fused2_kernel,
        out_shape=jax.ShapeDtypeStruct((batch, nr_classes), out_dtype),
        grid=grid,
        in_specs=[
            row_spec(latent_dim),
            const_spec((latent_dim, hidden)),
            const_spec((1, hidden)),
            const_spec((hidden, nr_classes)),
            const_spec((1, nr_classes)),
        ],
        out_specs=row_spec(nr_classes),
        compiler_params=compiler_params,
        cost_estimate=cost,
    )(x_c, w12, b12, w3, b3)


# --------------------------------------------------------------------------- #
# Init / reference
# --------------------------------------------------------------------------- #
def init_params(key, latent_dim, nr_classes):
    """Deterministic init mimicking PyTorch Linear default (uniform +-1/sqrt(fan_in))."""
    dims = [latent_dim, latent_dim // 2, latent_dim // 4, nr_classes]
    params = {}
    for i, (fan_in, fan_out) in enumerate(zip(dims[:-1], dims[1:]), start=1):
        key, kw, kb = jax.random.split(key, 3)
        bound = 1.0 / jnp.sqrt(fan_in)
        params[f"w{i}"] = jax.random.uniform(
            kw, (fan_in, fan_out), jnp.float32, -bound, bound)
        params[f"b{i}"] = jax.random.uniform(
            kb, (fan_out,), jnp.float32, -bound, bound)
    return params


def reference(x, params):
    h = x @ params["w1"] + params["b1"]
    h = h @ params["w2"] + params["b2"]
    return h @ params["w3"] + params["b3"]


if __name__ == "__main__":
    root = jax.random.PRNGKey(0)

    # ---- Path A: nr_classes <= latent_dim -> full fusion (single dot) ----
    latent_dim, nr_classes, batch = 32, 8, 2
    key, kx = jax.random.split(root)
    x = jax.random.normal(kx, (batch, latent_dim), jnp.float32)
    params = init_params(key, latent_dim, nr_classes)
    ref = reference(x, params)

    # exact f32 compute path (tight tolerance)
    fused_f32 = prepare_decoder_params(params, compute_dtype=jnp.float32)
    out_f32 = jax.block_until_ready(three_layer_decoder(x, fused_f32))
    assert out_f32.shape == (batch, nr_classes)
    assert jnp.allclose(out_f32, ref, atol=1e-4, rtol=1e-4), "f32 fused3 mismatch"

    # default bf16 compute path (bandwidth-optimized; relaxed tolerance)
    fused_bf16 = prepare_decoder_params(params)
    out_bf16 = jax.block_until_ready(three_layer_decoder(x, fused_bf16))
    assert out_bf16.shape == (batch, nr_classes)
    assert jnp.allclose(out_bf16, ref, atol=2e-2, rtol=2e-2), "bf16 fused3 mismatch"

    # ---- Path B: nr_classes > latent_dim -> partial fusion (two chained dots) ----
    latent_dim2, nr_classes2, batch2 = 16, 40, 10
    key2, kx2 = jax.random.split(jax.random.fold_in(root, 1))
    x2 = jax.random.normal(kx2, (batch2, latent_dim2), jnp.float32)
    params2 = init_params(key2, latent_dim2, nr_classes2)
    ref2 = reference(x2, params2)

    fused2_f32 = prepare_decoder_params(params2, compute_dtype=jnp.float32)
    out2 = jax.block_until_ready(three_layer_decoder(x2, fused2_f32))
    assert out2.shape == (batch2, nr_classes2)
    assert jnp.allclose(out2, ref2, atol=1e-4, rtol=1e-4), "f32 fused2 mismatch"

    print("KERNEL_OK")
</pallas_src>

<mosaic_0001>
module attributes {stable_mosaic.version = 11 : i64} {
  func.func @_fused3_kernel(%arg0: i32, %arg1: memref<8x32xf32, #tpu.memory_space<vmem>>, %arg2: memref<32x8xf32, #tpu.memory_space<vmem>>, %arg3: memref<1x8xf32, #tpu.memory_space<vmem>>, %arg4: memref<8x8xf32, #tpu.memory_space<vmem>>) attributes {dimension_semantics = [#tpu.dimension_semantics<parallel>], iteration_bounds = array<i64: 1>, scalar_prefetch = 0 : i64, scratch_operands = 0 : i64, tpu.core_type = #tpu.core_type<tc>, window_params = [{transform_indices = @transform_0, window_bounds = array<i64: 8, 32>}, {pipeline_mode = #tpu.pipeline_mode<synchronous>, transform_indices = @transform_1, window_bounds = array<i64: 32, 8>}, {pipeline_mode = #tpu.pipeline_mode<synchronous>, transform_indices = @transform_2, window_bounds = array<i64: 1, 8>}, {transform_indices = @transform_3, window_bounds = array<i64: 8, 8>}]} {
    %c0 = arith.constant 0 : index
    %c0_0 = arith.constant 0 : index
    %0 = vector.load %arg1[%c0, %c0_0] : memref<8x32xf32, #tpu.memory_space<vmem>>, vector<8x32xf32>
    %c0_1 = arith.constant 0 : index
    %c0_2 = arith.constant 0 : index
    %1 = vector.load %arg2[%c0_1, %c0_2] : memref<32x8xf32, #tpu.memory_space<vmem>>, vector<32x8xf32>
    %cst = arith.constant dense<0.000000e+00> : vector<8x8xf32>
    %2 = tpu.matmul %0, %1, %cst {dimension_numbers = #tpu.dot_dimension_numbers<[1], [0], [0], [1], [0, 0, 1, 1], [], []>} : vector<8x32xf32>, vector<32x8xf32>, vector<8x8xf32> -> vector<8x8xf32>
    %c0_3 = arith.constant 0 : index
    %c0_4 = arith.constant 0 : index
    %3 = vector.load %arg3[%c0_3, %c0_4] : memref<1x8xf32, #tpu.memory_space<vmem>>, vector<1x8xf32>
    %4 = vector.broadcast %3 : vector<1x8xf32> to vector<8x8xf32>
    %5 = arith.addf %2, %4 : vector<8x8xf32>
    %c0_5 = arith.constant 0 : index
    %c0_6 = arith.constant 0 : index
    %6 = vector.load %arg4[%c0_5, %c0_6] : memref<8x8xf32, #tpu.memory_space<vmem>>, vector<8x8xf32>
    tpu.vector_store %arg4[%c0_5, %c0_6], %5 {strides = array<i32>} : memref<8x8xf32, #tpu.memory_space<vmem>>, vector<8x8xf32>,
    return
  }
  func.func @transform_0(%arg0: i32) -> (i32, i32) {
    %c0_i32 = arith.constant 0 : i32
    %c0_i32_0 = arith.constant 0 : i32
    return %arg0, %c0_i32 : i32, i32
  }
  func.func @transform_1(%arg0: i32) -> (i32, i32) {
    %c0_i32 = arith.constant 0 : i32
    %c0_i32_0 = arith.constant 0 : i32
    %c0_i32_1 = arith.constant 0 : i32
    return %c0_i32, %c0_i32_0 : i32, i32
  }
  func.func @transform_2(%arg0: i32) -> (i32, i32) {
    %c0_i32 = arith.constant 0 : i32
    %c0_i32_0 = arith.constant 0 : i32
    %c0_i32_1 = arith.constant 0 : i32
    return %c0_i32, %c0_i32_0 : i32, i32
  }
  func.func @transform_3(%arg0: i32) -> (i32, i32) {
    %c0_i32 = arith.constant 0 : i32
    %c0_i32_0 = arith.constant 0 : i32
    return %arg0, %c0_i32 : i32, i32
  }
}

</mosaic_0001>

<llo_original>
// kernel: tpu_custom_call.1
$region0: #{tpu_custom_call.1}
  #allocation0 [shape = 'u32[]', space=smem, size = 0x4, offset = 0x4, fixed_abs, tag = 'smem constant byte address 0x4 - core index']
  #allocation1 [shape = 'u32[144,128]{1,0:T(1,128)}', space=vmem, size = 0x12000, scoped, tag = 'internal scratch']
  %s0 = inlined_call_operand.vmem [shape: f32[2,32], index: 0, kind: input, shape index: {}]
  %s1 = inlined_call_operand.vmem [shape: f32[32,8], index: 1, kind: input, shape index: {}]
  %s2 = inlined_call_operand.vmem [shape: f32[1,8], index: 2, kind: input, shape index: {}]
  %s3 = inlined_call_operand.hbm [shape: f32[2,8], index: 3, kind: output, shape index: {}]
  %s4 = sld [smem:[#allocation0]]
  $region22: #{tpu_custom_call.1} parent=0
    _
  %s6 = ssub.s32 1, %s4
  %s7 = scalar_select 0, %s6, %s4
  $region1: #{tpu_custom_call.1} parent=0
    #allocation2 [shape = 'u8[4096]{0}', space=vmem, size = 0x1000, scoped, tag = 'output window, operand 0, single buffered']
    #allocation3 [shape = 's32[1]{0}', space=sflag, size = 0x4, scoped, tag = 'scoped memory for tpu_custom_call.1']
    %8 = vsyncpa [#allocation3], 0
    // Predicated region
    $region2: #{tpu_custom_call.1} parent=1 // pred_check
      _
    $region3: #{tpu_custom_call.1} parent=1 // pred_check_branch
      %10 = sbr.rel (0) target = $region5
    $region4: #{tpu_custom_call.1} parent=1 // pred_region
      _
    $region5: #{tpu_custom_call.1} parent=1 // pred_fallthru
      _
    // Predicated region
    $region6: #{tpu_custom_call.1} parent=1 // pred_check
      _
    $region7: #{tpu_custom_call.1} parent=1 // pred_check_branch
      %12 = sbr.rel (0) target = $region9
    $region8: #{tpu_custom_call.1} parent=1 // pred_region
      _
    $region9: #{tpu_custom_call.1} parent=1 // pred_fallthru
      _
    // Predicated region
    $region10: #{tpu_custom_call.1} parent=1 // pred_check
      _
    $region11: #{tpu_custom_call.1} parent=1 // pred_check_branch
      %14 = sbr.rel (0) target = $region13
    $region12: #{tpu_custom_call.1} parent=1 // pred_region
      _
    $region13: #{tpu_custom_call.1} parent=1 // pred_fallthru
      _
    %v15 = vld [vmem:[%s0] sm:$0xff]
    %v16 = vld [vmem:[%s1] sm:$0xff]
    %v17 = vld [vmem:[%s1 + $0x8] sm:$0xff]
    %v18 = vld [vmem:[%s1 + $0x10] sm:$0xff]
    %v19 = vld [vmem:[%s1 + $0x18] sm:$0xff]
    %v20 = vld [vmem:[%s2] sm:$0x1]
    %v22 = vlaneseq
    %v23 = vshrl.u32 %v22, 7
    %v24 = vsub.s32 0, %v23
    %v25 = vrot.slane %v20, %v24
    %vm27 = vcmask 261120
    %v29 = vsel %vm27, %v15, 0
    %31 = vmatprep.subr.mxu0 0.0
    %32 = vmatpush1.msra.mxu0 %v16
    %33 = vmatprep.subr.mxu0 0.0
    %34 = vmatpush1.msra.mxu0 %v17
    %35 = vmatprep.subr.mxu0 0.0
    %36 = vmatpush1.msra.mxu0 %v18
    %37 = vmatprep.subr.mxu0 0.0
    %38 = vmatpush1.msra.mxu0 %v19
    %39 = vmatprep.subr.mxu0 0.0
    %40 = vmatpush1.msra.mxu0 0.0
    %41 = vmatprep.subr.mxu0 0.0
    %42 = vmatpush1.msra.mxu0 0.0
    %43 = vmatprep.subr.mxu0 0.0
    %44 = vmatpush1.msra.mxu0 0.0
    %45 = vmatprep.subr.mxu0 0.0
    %46 = vmatpush1.msra.mxu0 0.0
    %47 = vmatprep.subr.mxu0 0.0
    %48 = vmatpush1.msra.mxu0 0.0
    %49 = vmatprep.subr.mxu0 0.0
    %50 = vmatpush1.msra.mxu0 0.0
    %51 = vmatprep.subr.mxu0 0.0
    %52 = vmatpush1.msra.mxu0 0.0
    %53 = vmatprep.subr.mxu0 0.0
    %54 = vmatpush1.msra.mxu0 0.0
    %55 = vmatprep.subr.mxu0 0.0
    %56 = vmatpush1.msra.mxu0 0.0
    %57 = vmatprep.subr.mxu0 0.0
    %58 = vmatpush1.msra.mxu0 0.0
    %59 = vmatprep.subr.mxu0 0.0
    %60 = vmatpush1.msra.mxu0 0.0
    %61 = vmatprep.subr.mxu0 0.0
    %62 = vmatpush1.msra.mxu0 0.0
    %63 = vmatprep.subr.mxu0 0.0
    %64 = vmatpush1.msra.mxu0 0.0
    %65 = vmatprep.subr.mxu0 0.0
    %66 = vmatpush1.msra.mxu0 0.0
    %67 = vmatprep.subr.mxu0 0.0
    %68 = vmatpush1.msra.mxu0 0.0
    %69 = vmatprep.subr.mxu0 0.0
    %70 = vmatpush1.msra.mxu0 0.0
    %71 = vmatprep.subr.mxu0 0.0
    %72 = vmatpush1.msra.mxu0 0.0
    %73 = vmatprep.subr.mxu0 0.0
    %74 = vmatpush1.msra.mxu0 0.0
    %75 = vmatprep.subr.mxu0 0.0
    %76 = vmatpush1.msra.mxu0 0.0
    %77 = vmatprep.subr.mxu0 0.0
    %78 = vmatpush1.msra.mxu0 0.0
    %79 = vmatprep.subr.mxu0 0.0
    %80 = vmatpush1.msra.mxu0 0.0
    %81 = vmatprep.subr.mxu0 0.0
    %82 = vmatpush1.msra.mxu0 0.0
    %83 = vmatprep.subr.mxu0 0.0
    %84 = vmatpush1.msra.mxu0 0.0
    %85 = vmatprep.subr.mxu0 0.0
    %86 = vmatpush1.msra.mxu0 0.0
    %87 = vmatprep.subr.mxu0 0.0
    %88 = vmatpush1.msra.mxu0 0.0
    %89 = vmatprep.subr.mxu0 0.0
    %90 = vmatpush1.msra.mxu0 0.0
    %91 = vmatprep.subr.mxu0 0.0
    %92 = vmatpush1.msra.mxu0 0.0
    %93 = vmatprep.subr.mxu0 0.0
    %94 = vmatpush1.msra.mxu0 0.0
    %95 = vmatprep.mubr.f32.mxu0 0.0
    %96 = vmatmul.mubr.f32.gmra.mrb[0].mxu0 %v29
    %v97 = vpop.f32.mrb[0].mxu0
    %v98 = vadd.f32 %v25, %v97
    %v99 = vpop.f32.mrb[0].mxu0
    %100 = vdwg.mxu0
    %vm101 = vcmask 64512
    %102 = vst.msk [vmem:[#allocation2] sm:$0xff] %vm101, %v98
    // Predicated region
    $region14: #{tpu_custom_call.1} parent=1 // pred_check
      _
    $region15: #{tpu_custom_call.1} parent=1 // pred_check_branch
      %104 = sbr.rel (0) target = $region17
    $region16: #{tpu_custom_call.1} parent=1 // pred_region
      %s106 = ssub.s32 128, 32
      %107 = vsyncadd [#allocation3], %s106
      %s108 = sshll.u32 [#allocation2], 4
      %s109 = int_to_ptr.vmem [resolvable:$true] %s108
      %114 = dma.vmem_to_hbm [thread:$0]  %s109, 32, %s3, [#allocation3], 32, 32, 2
    $region17: #{tpu_custom_call.1} parent=1 // pred_fallthru
      _
    // Predicated region
    $region18: #{tpu_custom_call.1} parent=1 // pred_check
      _
    $region19: #{tpu_custom_call.1} parent=1 // pred_check_branch
      %116 = sbr.rel (0) target = $region21
    $region20: #{tpu_custom_call.1} parent=1 // pred_region
      %117 = dma.done [#allocation3], 128
    $region21: #{tpu_custom_call.1} parent=1 // pred_fallthru
      _
    %118 = vsyncpa [#allocation3], 1

</llo_original>
